<compile_context>
chip_gen: v7x
topology: tpu7x:2x2x1
jax: 0.10.0
libtpu: 0.0.40
codegen_flags: <defaults>
</compile_context>

<pallas_src>
import functools

import jax
import jax.numpy as jnp
from jax.experimental import pallas as pl
from jax.experimental.pallas import tpu as pltpu


def _tcl_kernel(x_ref, w_ref, b_ref, o_ref, *, K, H_out):
    # x_ref: (1, H_pad, C_pad)   w_ref: (K, C_pad, C_pad)
    # b_ref: (1, C_pad)          o_ref: (1, H_out, C_pad)
    C_pad = o_ref.shape[-1]
    # Accumulator starts as the broadcast bias -> no extra VALU pass at the end.
    acc = jnp.broadcast_to(b_ref[...].astype(jnp.float32), (H_out, C_pad))
    for k in range(K):  # K is a static Python int -> fully unrolled taps
        xk = x_ref[0, k:k + H_out, :]                 # (H_out, C_pad), static slice
        acc = acc + jnp.dot(xk, w_ref[k],             # (H_out,C_pad)@(C_pad,C_pad) on MXU
                            preferred_element_type=jnp.float32)
    o_ref[0] = acc                                    # lane-dense (C_pad % 128 == 0) store


def tcl_forward(x_nchw, weight, bias, conv_size):
    """x_nchw: (N, C, H, W); weight: (C_out, C_in, K, 1) [PyTorch OIHW]; bias: (C_out,)."""
    N, C, H, W = x_nchw.shape
    K = conv_size
    pad = K // 2
    H_out = H + 2 * pad - K + 1
    H_pad = H + 2 * pad
    C_pad = ((C + 127) // 128) * 128      # lane-dense channels (multiple of 128)
    B = N * W                             # each W column is an independent temporal conv

    # Wrapper glue (kept minimal): NCHW -> (N*W, H, C); zero-pad H (temporal) and C (lanes).
    x = jnp.transpose(x_nchw, (0, 3, 2, 1)).reshape(B, H, C)
    x = jnp.pad(x, ((0, 0), (pad, pad), (0, C_pad - C))).astype(jnp.float32)
    w = jnp.transpose(weight[:, :, :, 0], (2, 1, 0))                  # (K, C_in, C_out)
    w = jnp.pad(w, ((0, 0), (0, C_pad - C), (0, C_pad - C))).astype(jnp.float32)
    b = jnp.pad(bias, (0, C_pad - C)).reshape(1, C_pad).astype(jnp.float32)

    kern = functools.partial(_tcl_kernel, K=K, H_out=H_out)
    out = pl.pallas_call(
        kern,
        out_shape=jax.ShapeDtypeStruct((B, H_out, C_pad), jnp.float32),
        grid=(B,),
        in_specs=[
            pl.BlockSpec((1, H_pad, C_pad), lambda i: (i, 0, 0)),
            pl.BlockSpec((K, C_pad, C_pad), lambda i: (0, 0, 0)),
            pl.BlockSpec((1, C_pad), lambda i: (0, 0)),
        ],
        out_specs=pl.BlockSpec((1, H_out, C_pad), lambda i: (i, 0, 0)),
        compiler_params=pltpu.CompilerParams(dimension_semantics=("parallel",)),
    )(x, w, b)

    # Glue back: (N*W, H_out, C_pad) -> NCHW, drop channel padding.
    out = out[:, :, :C].reshape(N, W, H_out, C)
    return jnp.transpose(out, (0, 3, 2, 1))


def make_tcl_params(key, conv_size, dim):
    """Deterministic init matching the module: kaiming_normal_ on weight, PyTorch-default bias."""
    kw, kb = jax.random.split(key)
    fan_in = dim * conv_size * 1
    std = (2.0 / fan_in) ** 0.5                                   # kaiming_normal_, fan_in, gain=sqrt(2)
    weight = std * jax.random.normal(kw, (dim, dim, conv_size, 1), dtype=jnp.float32)
    bound = 1.0 / (fan_in ** 0.5)                                 # Conv2d default bias init
    bias = jax.random.uniform(kb, (dim,), minval=-bound, maxval=bound, dtype=jnp.float32)
    return weight, bias


if __name__ == "__main__":
    # TA3N uses TCL on temporal features shaped (batch, feat_dim, num_segments, 1).
    conv_size = 3
    dim = 32          # channels (feat_dim)
    N, H, W = 2, 8, 1  # batch, num_segments, trailing width 1

    key = jax.random.PRNGKey(0)
    kx, kp = jax.random.split(key)
    x = jax.random.normal(kx, (N, dim, H, W), dtype=jnp.float32)
    weight, bias = make_tcl_params(kp, conv_size, dim)

    out = tcl_forward(x, weight, bias, conv_size)
    out = jax.block_until_ready(out)

    # Reference check against XLA's conv (same NCHW/OIHW semantics as PyTorch).
    pad = conv_size // 2
    ref = jax.lax.conv_general_dilated(
        x, weight, window_strides=(1, 1), padding=((pad, pad), (0, 0)),
        dimension_numbers=("NCHW", "OIHW", "NCHW"),
    ) + bias.reshape(1, -1, 1, 1)
    assert out.shape == ref.shape, (out.shape, ref.shape)
    assert jnp.allclose(out, ref, atol=1e-5, rtol=1e-5)

    print("KERNEL_OK")
</pallas_src>

<mosaic_0001>
module attributes {stable_mosaic.version = 11 : i64} {
  func.func @_tcl_kernel(%arg0: i32, %arg1: memref<1x10x128xf32, #tpu.memory_space<vmem>>, %arg2: memref<3x128x128xf32, #tpu.memory_space<vmem>>, %arg3: memref<1x128xf32, #tpu.memory_space<vmem>>, %arg4: memref<1x8x128xf32, #tpu.memory_space<vmem>>) attributes {dimension_semantics = [#tpu.dimension_semantics<parallel>], iteration_bounds = array<i64: 2>, scalar_prefetch = 0 : i64, scratch_operands = 0 : i64, tpu.core_type = #tpu.core_type<tc>, window_params = [{transform_indices = @transform_0, window_bounds = array<i64: 1, 10, 128>}, {pipeline_mode = #tpu.pipeline_mode<synchronous>, transform_indices = @transform_1, window_bounds = array<i64: 3, 128, 128>}, {pipeline_mode = #tpu.pipeline_mode<synchronous>, transform_indices = @transform_2, window_bounds = array<i64: 1, 128>}, {transform_indices = @transform_3, window_bounds = array<i64: 1, 8, 128>}]} {
    %c0 = arith.constant 0 : index
    %c0_0 = arith.constant 0 : index
    %0 = vector.load %arg3[%c0, %c0_0] : memref<1x128xf32, #tpu.memory_space<vmem>>, vector<1x128xf32>
    %1 = vector.shape_cast %0 : vector<1x128xf32> to vector<1x128xf32>
    %2 = vector.broadcast %1 : vector<1x128xf32> to vector<8x128xf32>
    %c0_1 = arith.constant 0 : index
    %c0_2 = arith.constant 0 : index
    %c0_3 = arith.constant 0 : index
    %3 = vector.load %arg1[%c0_1, %c0_2, %c0_3] : memref<1x10x128xf32, #tpu.memory_space<vmem>>, vector<1x8x128xf32>
    %4 = vector.shape_cast %3 : vector<1x8x128xf32> to vector<8x128xf32>
    %c0_4 = arith.constant 0 : index
    %c0_5 = arith.constant 0 : index
    %c0_6 = arith.constant 0 : index
    %5 = vector.load %arg2[%c0_4, %c0_5, %c0_6] : memref<3x128x128xf32, #tpu.memory_space<vmem>>, vector<1x128x128xf32>
    %6 = vector.shape_cast %5 : vector<1x128x128xf32> to vector<128x128xf32>
    %cst = arith.constant dense<0.000000e+00> : vector<8x128xf32>
    %7 = tpu.matmul %4, %6, %cst {dimension_numbers = #tpu.dot_dimension_numbers<[1], [0], [0], [1], [0, 0, 1, 1], [], []>} : vector<8x128xf32>, vector<128x128xf32>, vector<8x128xf32> -> vector<8x128xf32>
    %8 = arith.addf %2, %7 : vector<8x128xf32>
    %c0_7 = arith.constant 0 : index
    %c1 = arith.constant 1 : index
    %c0_8 = arith.constant 0 : index
    %9 = vector.load %arg1[%c0_7, %c1, %c0_8] : memref<1x10x128xf32, #tpu.memory_space<vmem>>, vector<1x8x128xf32>
    %10 = vector.shape_cast %9 : vector<1x8x128xf32> to vector<8x128xf32>
    %c1_9 = arith.constant 1 : index
    %c0_10 = arith.constant 0 : index
    %c0_11 = arith.constant 0 : index
    %11 = vector.load %arg2[%c1_9, %c0_10, %c0_11] : memref<3x128x128xf32, #tpu.memory_space<vmem>>, vector<1x128x128xf32>
    %12 = vector.shape_cast %11 : vector<1x128x128xf32> to vector<128x128xf32>
    %cst_12 = arith.constant dense<0.000000e+00> : vector<8x128xf32>
    %13 = tpu.matmul %10, %12, %cst_12 {dimension_numbers = #tpu.dot_dimension_numbers<[1], [0], [0], [1], [0, 0, 1, 1], [], []>} : vector<8x128xf32>, vector<128x128xf32>, vector<8x128xf32> -> vector<8x128xf32>
    %14 = arith.addf %8, %13 : vector<8x128xf32>
    %c0_13 = arith.constant 0 : index
    %c2 = arith.constant 2 : index
    %c0_14 = arith.constant 0 : index
    %15 = vector.load %arg1[%c0_13, %c2, %c0_14] : memref<1x10x128xf32, #tpu.memory_space<vmem>>, vector<1x8x128xf32>
    %16 = vector.shape_cast %15 : vector<1x8x128xf32> to vector<8x128xf32>
    %c2_15 = arith.constant 2 : index
    %c0_16 = arith.constant 0 : index
    %c0_17 = arith.constant 0 : index
    %17 = vector.load %arg2[%c2_15, %c0_16, %c0_17] : memref<3x128x128xf32, #tpu.memory_space<vmem>>, vector<1x128x128xf32>
    %18 = vector.shape_cast %17 : vector<1x128x128xf32> to vector<128x128xf32>
    %cst_18 = arith.constant dense<0.000000e+00> : vector<8x128xf32>
    %19 = tpu.matmul %16, %18, %cst_18 {dimension_numbers = #tpu.dot_dimension_numbers<[1], [0], [0], [1], [0, 0, 1, 1], [], []>} : vector<8x128xf32>, vector<128x128xf32>, vector<8x128xf32> -> vector<8x128xf32>
    %20 = arith.addf %14, %19 : vector<8x128xf32>
    %c0_19 = arith.constant 0 : index
    %c0_20 = arith.constant 0 : index
    %c0_21 = arith.constant 0 : index
    %21 = vector.load %arg4[%c0_19, %c0_20, %c0_21] : memref<1x8x128xf32, #tpu.memory_space<vmem>>, vector<1x8x128xf32>
    %22 = vector.shape_cast %21 : vector<1x8x128xf32> to vector<8x128xf32>
    %23 = vector.shape_cast %20 : vector<8x128xf32> to vector<1x8x128xf32>
    tpu.vector_store %arg4[%c0_19, %c0_20, %c0_21], %23 {strides = array<i32>} : memref<1x8x128xf32, #tpu.memory_space<vmem>>, vector<1x8x128xf32>,
    return
  }
  func.func @transform_0(%arg0: i32) -> (i32, i32, i32) {
    %c0_i32 = arith.constant 0 : i32
    %c0_i32_0 = arith.constant 0 : i32
    %c0_i32_1 = arith.constant 0 : i32
    return %arg0, %c0_i32, %c0_i32_0 : i32, i32, i32
  }
  func.func @transform_1(%arg0: i32) -> (i32, i32, i32) {
    %c0_i32 = arith.constant 0 : i32
    %c0_i32_0 = arith.constant 0 : i32
    %c0_i32_1 = arith.constant 0 : i32
    %c0_i32_2 = arith.constant 0 : i32
    return %c0_i32, %c0_i32_0, %c0_i32_1 : i32, i32, i32
  }
  func.func @transform_2(%arg0: i32) -> (i32, i32) {
    %c0_i32 = arith.constant 0 : i32
    %c0_i32_0 = arith.constant 0 : i32
    %c0_i32_1 = arith.constant 0 : i32
    return %c0_i32, %c0_i32_0 : i32, i32
  }
  func.func @transform_3(%arg0: i32) -> (i32, i32, i32) {
    %c0_i32 = arith.constant 0 : i32
    %c0_i32_0 = arith.constant 0 : i32
    %c0_i32_1 = arith.constant 0 : i32
    return %arg0, %c0_i32, %c0_i32_0 : i32, i32, i32
  }
}

</mosaic_0001>

<llo_original>
// kernel: tpu_custom_call.1
$region0: #{tpu_custom_call.1}
  #allocation0 [shape = 'u32[]', space=smem, size = 0x4, offset = 0x4, fixed_abs, tag = 'smem constant byte address 0x4 - core index']
  #allocation1 [shape = 'u32[144,128]{1,0:T(1,128)}', space=vmem, size = 0x12000, scoped, tag = 'internal scratch']
  %s0 = inlined_call_operand.vmem [shape: f32[2,10,128], index: 0, kind: input, shape index: {}]
  %s1 = inlined_call_operand.hbm [shape: f32[3,128,128], index: 1, kind: input, shape index: {}]
  %s2 = inlined_call_operand.vmem [shape: f32[1,128], index: 2, kind: input, shape index: {}]
  %s3 = inlined_call_operand.hbm [shape: f32[2,8,128], index: 3, kind: output, shape index: {}]
  %s4 = sld [smem:[#allocation0]]
  $region49: #{tpu_custom_call.1} parent=0
    _
  %s6 = ssub.s32 1, %s4
  %s7 = scalar_select 0, %s6, %s4
  $region1: #{tpu_custom_call.1} parent=0
    #allocation2 [shape = 'u8[196608]{0}', space=vmem, size = 0x30000, scoped, tag = 'input window, operand 1, single buffered']
    #allocation3 [shape = 's32[2]{0}', space=sflag, size = 0x8, scoped, tag = 'scoped memory for tpu_custom_call.1']
    #allocation4 [shape = 's32[2]{0}', space=sflag, size = 0x8, scoped, tag = 'scoped memory for tpu_custom_call.1']
    #allocation5 [shape = 'u8[8192]{0}', space=vmem, size = 0x2000, scoped, tag = 'output window, operand 0']
    %8 = vsyncpa [#allocation3], 0
    %9 = vsyncpa [#allocation4], 0
    %s10 = scalar_lea.sflag [#allocation4], 1
    %11 = vsyncpa %s10, 0
    loop: start=0, step=1, limit=4
    $region2: #{tpu_custom_call.1} parent=1 // loop_pre_header
      _
    $region3: #{tpu_custom_call.1} parent=1 // loop_header
      %s13 = sphi 0, %s17
      %p14 = scmp.ge.s32.totalorder %s13, 4
      %s23 = sphi 0, %s25
      %s26 = sphi 0, %s23
      %s27 = sphi 0, %s26
      %s43 = sphi 0, %s27
      %s47 = sphi 0, %s47
      %s49 = sphi 0, %s47
      %s50 = sphi 0, %s49
      %s64 = sphi 0, %s50
      %s68 = sphi 0, %s68
      %s70 = sphi 0, %s68
      %s71 = sphi 0, %s70
      %s85 = sphi 0, %s71
      %s91 = sphi 0, %s93
      %s94 = sphi 0, %s91
      %s95 = sphi 0, %s94
      %s111 = sphi 0, %s95
    $region4: #{tpu_custom_call.1} parent=1 // loop_header_branch
      %16 = sbr.rel (%p14) target = $region8
    $region5: #{tpu_custom_call.1} parent=1 // loop_body
      %s18 = ssub.s32 %s13, 1
      %s19 = ssub.s32 %s13, 2
      %s20 = sadd.s32 %s13, 1
      %s21 = ssub.s32 %s13, %s20
      %p22 = scmp.eq.s32.totalorder %s21, 0
      %s24 = sadd.s32 %s23, 1
      %s25 = scalar_select %p22, %s23, %s24
      %p28 = pneg %p22
      %p29 = scmp.eq.s32.totalorder %s13, 1
      %p30 = por %p28, %p29
      %p31 = scmp.ne.s32.totalorder %s23, %s26
      %p32 = scmp.eq.s32.totalorder %s13, 0
      %p33 = por %p31, %p32
      %p34 = scmp.ne.s32.totalorder %s23, %s26
      %p35 = scmp.eq.s32.totalorder %s18, 1
      %p36 = por %p34, %p35
      %p37 = scmp.ne.s32.totalorder %s26, %s27
      %p38 = scmp.eq.s32.totalorder %s18, 0
      %p39 = por %p37, %p38
      %p40 = scmp.ne.s32.totalorder %s26, %s27
      %p41 = scmp.eq.s32.totalorder %s19, 1
      %p42 = por %p40, %p41
      %p44 = scmp.ne.s32.totalorder %s27, %s43
      %p45 = scmp.eq.s32.totalorder %s19, 0
      %p46 = por %p44, %p45
      %s48 = sadd.s32 %s47, 1
      %p51 = scmp.eq.s32.totalorder %s13, 1
      %p52 = scmp.ne.s32.totalorder %s47, %s49
      %p53 = scmp.eq.s32.totalorder %s13, 0
      %p54 = por %p52, %p53
      %p55 = scmp.ne.s32.totalorder %s47, %s49
      %p56 = scmp.eq.s32.totalorder %s18, 1
      %p57 = por %p55, %p56
      %p58 = scmp.ne.s32.totalorder %s49, %s50
      %p59 = scmp.eq.s32.totalorder %s18, 0
      %p60 = por %p58, %p59
      %p61 = scmp.ne.s32.totalorder %s49, %s50
      %p62 = scmp.eq.s32.totalorder %s19, 1
      %p63 = por %p61, %p62
      %p65 = scmp.ne.s32.totalorder %s50, %s64
      %p66 = scmp.eq.s32.totalorder %s19, 0
      %p67 = por %p65, %p66
      %s69 = sadd.s32 %s68, 1
      %p72 = scmp.eq.s32.totalorder %s13, 1
      %p73 = scmp.ne.s32.totalorder %s68, %s70
      %p74 = scmp.eq.s32.totalorder %s13, 0
      %p75 = por %p73, %p74
      %p76 = scmp.ne.s32.totalorder %s68, %s70
      %p77 = scmp.eq.s32.totalorder %s18, 1
      %p78 = por %p76, %p77
      %p79 = scmp.ne.s32.totalorder %s70, %s71
      %p80 = scmp.eq.s32.totalorder %s18, 0
      %p81 = por %p79, %p80
      %p82 = scmp.ne.s32.totalorder %s70, %s71
      %p83 = scmp.eq.s32.totalorder %s19, 1
      %p84 = por %p82, %p83
      %p86 = scmp.ne.s32.totalorder %s71, %s85
      %p87 = scmp.eq.s32.totalorder %s19, 0
      %p88 = por %p86, %p87
      %s89 = ssub.s32 %s13, %s20
      %p90 = scmp.eq.s32.totalorder %s89, 0
      %s92 = sadd.s32 %s91, 1
      %s93 = scalar_select %p90, %s91, %s92
      %p96 = pneg %p90
      %p97 = scmp.eq.s32.totalorder %s13, 1
      %p98 = por %p96, %p97
      %p99 = scmp.ne.s32.totalorder %s91, %s94
      %p100 = scmp.eq.s32.totalorder %s13, 0
      %p101 = por %p99, %p100
      %p102 = scmp.ne.s32.totalorder %s91, %s94
      %p103 = scmp.eq.s32.totalorder %s18, 1
      %p104 = por %p102, %p103
      %p105 = scmp.ne.s32.totalorder %s94, %s95
      %p106 = scmp.eq.s32.totalorder %s18, 0
      %p107 = por %p105, %p106
      %p108 = scmp.ne.s32.totalorder %s94, %s95
      %p109 = scmp.eq.s32.totalorder %s19, 1
      %p110 = por %p108, %p109
      %p112 = scmp.ne.s32.totalorder %s95, %s111
      %p113 = scmp.eq.s32.totalorder %s19, 0
      %p114 = por %p112, %p113
      %p115 = scmp.le.s32.totalorder 1, %s13
      %p116 = scmp.lt.s32.totalorder %s13, 3
      %p117 = pnand %p115, %p116
      %p118 = pneg %p117
      // Predicated region
      $region9: #{tpu_custom_call.1} parent=5 // pred_check
        _
      $region10: #{tpu_custom_call.1} parent=5 // pred_check_branch
        %120 = sbr.rel (%p117) target = $region12
      $region11: #{tpu_custom_call.1} parent=5 // pred_region
        %s121 = ssub.s32 %s13, 1
        // Predicated region
        $region13: #{tpu_custom_call.1} parent=11 // pred_check
          %p122 = pneg %p60
        $region14: #{tpu_custom_call.1} parent=11 // pred_check_branch
          %124 = sbr.rel (%p122) target = $region16
        $region15: #{tpu_custom_call.1} parent=11 // pred_region
          %s126 = ssub.s32 6144, 6144
          %127 = vsyncadd [#allocation3], %s126
          %s128 = sshll.u32 [#allocation2], 4
          %s129 = int_to_ptr.vmem [resolvable:$true] %s128
          %134 = dma.hbm_to_vmem [thread:$0]  %s1, 6144, %s129, [#allocation3], 128, 128, 8
        $region16: #{tpu_custom_call.1} parent=11 // pred_fallthru
          _
        // Predicated region
        $region17: #{tpu_custom_call.1} parent=11 // pred_check
          %p135 = pneg %p81
        $region18: #{tpu_custom_call.1} parent=11 // pred_check_branch
          %137 = sbr.rel (%p135) target = $region20
        $region19: #{tpu_custom_call.1} parent=11 // pred_region
          _
        $region20: #{tpu_custom_call.1} parent=11 // pred_fallthru
          _
      $region12: #{tpu_custom_call.1} parent=5 // pred_fallthru
        _
      %p138 = scmp.lt.s32.totalorder %s13, 2
      // Predicated region
      $region21: #{tpu_custom_call.1} parent=5 // pred_check
        %p139 = pneg %p138
      $region22: #{tpu_custom_call.1} parent=5 // pred_check_branch
        %141 = sbr.rel (%p139) target = $region24
      $region23: #{tpu_custom_call.1} parent=5 // pred_region
        // Predicated region
        $region25: #{tpu_custom_call.1} parent=23 // pred_check
          %p142 = pneg %p33
        $region26: #{tpu_custom_call.1} parent=23 // pred_check_branch
          %144 = sbr.rel (%p142) target = $region28
        $region27: #{tpu_custom_call.1} parent=23 // pred_region
          %p145 = scmp.lt.s32.totalorder %s13, 1
          %s146 = scalar_select %p145, %s13, 1
          %s147 = smul.addr %s146, 2
          %s148 = smul.addr %s147, 8
          %s149 = scalar_lea.vmem %s0, %s148
        $region28: #{tpu_custom_call.1} parent=23 // pred_fallthru
          _
      $region24: #{tpu_custom_call.1} parent=5 // pred_fallthru
        _
      %p150 = scmp.le.s32.totalorder 1, %s13
      %p151 = scmp.lt.s32.totalorder %s13, 3
      %p152 = pnand %p150, %p151
      %p153 = pneg %p152
      // Predicated region
      $region29: #{tpu_custom_call.1} parent=5 // pred_check
        _
      $region30: #{tpu_custom_call.1} parent=5 // pred_check_branch
        %155 = sbr.rel (%p152) target = $region32
      $region31: #{tpu_custom_call.1} parent=5 // pred_region
        %s156 = ssub.s32 %s13, 1
        // Predicated region
        $region33: #{tpu_custom_call.1} parent=31 // pred_check
          %p157 = pneg %p60
        $region34: #{tpu_custom_call.1} parent=31 // pred_check_branch
          %159 = sbr.rel (%p157) target = $region36
        $region35: #{tpu_custom_call.1} parent=31 // pred_region
          %160 = dma.done [#allocation3], 6144
        $region36: #{tpu_custom_call.1} parent=31 // pred_fallthru
          _
        %p161 = scmp.lt.s32.totalorder %s18, 1
        %s162 = scalar_select %p161, %s18, 1
        %s163 = smul.addr %s162, 2
        %s164 = smul.addr %s163, 8
        %s165 = scalar_lea.vmem %s0, %s164
        %p166 = pneg %p39
        %p167 = pneg %p36
        %p168 = pneg %p60
        %p169 = pneg %p57
        %p170 = pneg %p81
        %p171 = pneg %p78
        %p172 = pneg %p107
        %p173 = pneg %p104
        %s174 = sand.u32 %s94, 1
        %s175 = scalar_lea.sflag [#allocation4], %s174
        %s176 = sand.u32 %s94, 1
        %s177 = smul.addr %s176, 8
        %s178 = scalar_lea.vmem [#allocation5], %s177
        %p179 = scmp.lt.s32.totalorder %s18, 1
        %s180 = scalar_select %p179, %s18, 1
        %s181 = smul.addr %s180, 2
        %s182 = smul.addr %s181, 8
        %s183 = scalar_lea.vmem %s0, %s182
        %v184 = vld [vmem:[%s2] sm:$0x1]
        %v186 = vlaneseq
        %v187 = vshrl.u32 %v186, 7
        %v188 = vsub.s32 0, %v187
        %v189 = vrot.slane %v184, %v188
        %v191 = vld [vmem:[%s183] sm:$0xff]
        %v192 = vld [vmem:[#allocation2] sm:$0xff]
        %v193 = vld [vmem:[#allocation2 + $0x8] sm:$0xff]
        %v194 = vld [vmem:[#allocation2 + $0x10] sm:$0xff]
        %v195 = vld [vmem:[#allocation2 + $0x18] sm:$0xff]
        %v196 = vld [vmem:[#allocation2 + $0x20] sm:$0xff]
        %v197 = vld [vmem:[#allocation2 + $0x28] sm:$0xff]
        %v198 = vld [vmem:[#allocation2 + $0x30] sm:$0xff]
        %v199 = vld [vmem:[#allocation2 + $0x38] sm:$0xff]
        %v200 = vld [vmem:[#allocation2 + $0x40] sm:$0xff]
        %v201 = vld [vmem:[#allocation2 + $0x48] sm:$0xff]
        %v202 = vld [vmem:[#allocation2 + $0x50] sm:$0xff]
        %v203 = vld [vmem:[#allocation2 + $0x58] sm:$0xff]
        %v204 = vld [vmem:[#allocation2 + $0x60] sm:$0xff]
        %v205 = vld [vmem:[#allocation2 + $0x68] sm:$0xff]
        %v206 = vld [vmem:[#allocation2 + $0x70] sm:$0xff]
        %v207 = vld [vmem:[#allocation2 + $0x78] sm:$0xff]
        %208 = vmatprep.subr.mxu0 0.0
        %209 = vmatpush1.msra.mxu0 %v192
        %210 = vmatprep.subr.mxu0 0.0
        %211 = vmatpush1.msra.mxu0 %v193
        %212 = vmatprep.subr.mxu0 0.0
        %213 = vmatpush1.msra.mxu0 %v194
        %214 = vmatprep.subr.mxu0 0.0
        %215 = vmatpush1.msra.mxu0 %v195
        %216 = vmatprep.subr.mxu0 0.0
        %217 = vmatpush1.msra.mxu0 %v196
        %218 = vmatprep.subr.mxu0 0.0
        %219 = vmatpush1.msra.mxu0 %v197
        %220 = vmatprep.subr.mxu0 0.0
        %221 = vmatpush1.msra.mxu0 %v198
        %222 = vmatprep.subr.mxu0 0.0
        %223 = vmatpush1.msra.mxu0 %v199
        %224 = vmatprep.subr.mxu0 0.0
        %225 = vmatpush1.msra.mxu0 %v200
        %226 = vmatprep.subr.mxu0 0.0
        %227 = vmatpush1.msra.mxu0 %v201
        %228 = vmatprep.subr.mxu0 0.0
        %229 = vmatpush1.msra.mxu0 %v202
        %230 = vmatprep.subr.mxu0 0.0
        %231 = vmatpush1.msra.mxu0 %v203
        %232 = vmatprep.subr.mxu0 0.0
        %233 = vmatpush1.msra.mxu0 %v204
        %234 = vmatprep.subr.mxu0 0.0
        %235 = vmatpush1.msra.mxu0 %v205
        %236 = vmatprep.subr.mxu0 0.0
        %237 = vmatpush1.msra.mxu0 %v206
        %238 = vmatprep.subr.mxu0 0.0
        %239 = vmatpush1.msra.mxu0 %v207
        %240 = vmatprep.subr.mxu0 0.0
        %241 = vmatpush1.msra.mxu0 0.0
        %242 = vmatprep.subr.mxu0 0.0
        %243 = vmatpush1.msra.mxu0 0.0
        %244 = vmatprep.subr.mxu0 0.0
        %245 = vmatpush1.msra.mxu0 0.0
        %246 = vmatprep.subr.mxu0 0.0
        %247 = vmatpush1.msra.mxu0 0.0
        %248 = vmatprep.subr.mxu0 0.0
        %249 = vmatpush1.msra.mxu0 0.0
        %250 = vmatprep.subr.mxu0 0.0
        %251 = vmatpush1.msra.mxu0 0.0
        %252 = vmatprep.subr.mxu0 0.0
        %253 = vmatpush1.msra.mxu0 0.0
        %254 = vmatprep.subr.mxu0 0.0
        %255 = vmatpush1.msra.mxu0 0.0
        %256 = vmatprep.subr.mxu0 0.0
        %257 = vmatpush1.msra.mxu0 0.0
        %258 = vmatprep.subr.mxu0 0.0
        %259 = vmatpush1.msra.mxu0 0.0
        %260 = vmatprep.subr.mxu0 0.0
        %261 = vmatpush1.msra.mxu0 0.0
        %262 = vmatprep.subr.mxu0 0.0
        %263 = vmatpush1.msra.mxu0 0.0
        %264 = vmatprep.subr.mxu0 0.0
        %265 = vmatpush1.msra.mxu0 0.0
        %266 = vmatprep.subr.mxu0 0.0
        %267 = vmatpush1.msra.mxu0 0.0
        %268 = vmatprep.subr.mxu0 0.0
        %269 = vmatpush1.msra.mxu0 0.0
        %270 = vmatprep.subr.mxu0 0.0
        %271 = vmatpush1.msra.mxu0 0.0
        %272 = vmatprep.mubr.f32.mxu0 0.0
        %273 = vmatmul.mubr.f32.gmra.mrb[0].mxu0 %v191
        %v274 = vpop.f32.mrb[0].mxu0
        %v275 = vadd.f32 0.0, %v274
        %v276 = vpop.f32.mrb[0].mxu0
        %277 = vdwg.mxu0
        %v278 = vadd.f32 %v189, %v275
        %v279 = vld [vmem:[%s183 + $0x1] sm:$0xff]
        %s280 = scalar_lea.vmem [#allocation2], 128
        %v281 = vld [vmem:[%s280] sm:$0xff]
        %v282 = vld [vmem:[%s280 + $0x8] sm:$0xff]
        %v283 = vld [vmem:[%s280 + $0x10] sm:$0xff]
        %v284 = vld [vmem:[%s280 + $0x18] sm:$0xff]
        %v285 = vld [vmem:[%s280 + $0x20] sm:$0xff]
        %v286 = vld [vmem:[%s280 + $0x28] sm:$0xff]
        %v287 = vld [vmem:[%s280 + $0x30] sm:$0xff]
        %v288 = vld [vmem:[%s280 + $0x38] sm:$0xff]
        %v289 = vld [vmem:[%s280 + $0x40] sm:$0xff]
        %v290 = vld [vmem:[%s280 + $0x48] sm:$0xff]
        %v291 = vld [vmem:[%s280 + $0x50] sm:$0xff]
        %v292 = vld [vmem:[%s280 + $0x58] sm:$0xff]
        %v293 = vld [vmem:[%s280 + $0x60] sm:$0xff]
        %v294 = vld [vmem:[%s280 + $0x68] sm:$0xff]
        %v295 = vld [vmem:[%s280 + $0x70] sm:$0xff]
        %v296 = vld [vmem:[%s280 + $0x78] sm:$0xff]
        %297 = vmatprep.subr.mxu0 0.0
        %298 = vmatpush1.msra.mxu0 %v281
        %299 = vmatprep.subr.mxu0 0.0
        %300 = vmatpush1.msra.mxu0 %v282
        %301 = vmatprep.subr.mxu0 0.0
        %302 = vmatpush1.msra.mxu0 %v283
        %303 = vmatprep.subr.mxu0 0.0
        %304 = vmatpush1.msra.mxu0 %v284
        %305 = vmatprep.subr.mxu0 0.0
        %306 = vmatpush1.msra.mxu0 %v285
        %307 = vmatprep.subr.mxu0 0.0
        %308 = vmatpush1.msra.mxu0 %v286
        %309 = vmatprep.subr.mxu0 0.0
        %310 = vmatpush1.msra.mxu0 %v287
        %311 = vmatprep.subr.mxu0 0.0
        %312 = vmatpush1.msra.mxu0 %v288
        %313 = vmatprep.subr.mxu0 0.0
        %314 = vmatpush1.msra.mxu0 %v289
        %315 = vmatprep.subr.mxu0 0.0
        %316 = vmatpush1.msra.mxu0 %v290
        %317 = vmatprep.subr.mxu0 0.0
        %318 = vmatpush1.msra.mxu0 %v291
        %319 = vmatprep.subr.mxu0 0.0
        %320 = vmatpush1.msra.mxu0 %v292
        %321 = vmatprep.subr.mxu0 0.0
        %322 = vmatpush1.msra.mxu0 %v293
        %323 = vmatprep.subr.mxu0 0.0
        %324 = vmatpush1.msra.mxu0 %v294
        %325 = vmatprep.subr.mxu0 0.0
        %326 = vmatpush1.msra.mxu0 %v295
        %327 = vmatprep.subr.mxu0 0.0
        %328 = vmatpush1.msra.mxu0 %v296
        %329 = vmatprep.subr.mxu0 0.0
        %330 = vmatpush1.msra.mxu0 0.0
        %331 = vmatprep.subr.mxu0 0.0
        %332 = vmatpush1.msra.mxu0 0.0
        %333 = vmatprep.subr.mxu0 0.0
        %334 = vmatpush1.msra.mxu0 0.0
        %335 = vmatprep.subr.mxu0 0.0
        %336 = vmatpush1.msra.mxu0 0.0
        %337 = vmatprep.subr.mxu0 0.0
        %338 = vmatpush1.msra.mxu0 0.0
        %339 = vmatprep.subr.mxu0 0.0
        %340 = vmatpush1.msra.mxu0 0.0
        %341 = vmatprep.subr.mxu0 0.0
        %342 = vmatpush1.msra.mxu0 0.0
        %343 = vmatprep.subr.mxu0 0.0
        %344 = vmatpush1.msra.mxu0 0.0
        %345 = vmatprep.subr.mxu0 0.0
        %346 = vmatpush1.msra.mxu0 0.0
        %347 = vmatprep.subr.mxu0 0.0
        %348 = vmatpush1.msra.mxu0 0.0
        %349 = vmatprep.subr.mxu0 0.0
        %350 = vmatpush1.msra.mxu0 0.0
        %351 = vmatprep.subr.mxu0 0.0
        %352 = vmatpush1.msra.mxu0 0.0
        %353 = vmatprep.subr.mxu0 0.0
        %354 = vmatpush1.msra.mxu0 0.0
        %355 = vmatprep.subr.mxu0 0.0
        %356 = vmatpush1.msra.mxu0 0.0
        %357 = vmatprep.subr.mxu0 0.0
        %358 = vmatpush1.msra.mxu0 0.0
        %359 = vmatprep.subr.mxu0 0.0
        %360 = vmatpush1.msra.mxu0 0.0
        %361 = vmatprep.mubr.f32.mxu0 0.0
        %362 = vmatmul.mubr.f32.gmra.mrb[0].mxu0 %v279
        %v363 = vpop.f32.mrb[0].mxu0
        %v364 = vadd.f32 0.0, %v363
        %v365 = vpop.f32.mrb[0].mxu0
        %366 = vdwg.mxu0
        %v367 = vadd.f32 %v278, %v364
        %v368 = vld [vmem:[%s183 + $0x2] sm:$0xff]
        %s369 = scalar_lea.vmem [#allocation2], 256
        %v370 = vld [vmem:[%s369] sm:$0xff]
        %v371 = vld [vmem:[%s369 + $0x8] sm:$0xff]
        %v372 = vld [vmem:[%s369 + $0x10] sm:$0xff]
        %v373 = vld [vmem:[%s369 + $0x18] sm:$0xff]
        %v374 = vld [vmem:[%s369 + $0x20] sm:$0xff]
        %v375 = vld [vmem:[%s369 + $0x28] sm:$0xff]
        %v376 = vld [vmem:[%s369 + $0x30] sm:$0xff]
        %v377 = vld [vmem:[%s369 + $0x38] sm:$0xff]
        %v378 = vld [vmem:[%s369 + $0x40] sm:$0xff]
        %v379 = vld [vmem:[%s369 + $0x48] sm:$0xff]
        %v380 = vld [vmem:[%s369 + $0x50] sm:$0xff]
        %v381 = vld [vmem:[%s369 + $0x58] sm:$0xff]
        %v382 = vld [vmem:[%s369 + $0x60] sm:$0xff]
        %v383 = vld [vmem:[%s369 + $0x68] sm:$0xff]
        %v384 = vld [vmem:[%s369 + $0x70] sm:$0xff]
        %v385 = vld [vmem:[%s369 + $0x78] sm:$0xff]
        %386 = vmatprep.subr.mxu0 0.0
        %387 = vmatpush1.msra.mxu0 %v370
        %388 = vmatprep.subr.mxu0 0.0
        %389 = vmatpush1.msra.mxu0 %v371
        %390 = vmatprep.subr.mxu0 0.0
        %391 = vmatpush1.msra.mxu0 %v372
        %392 = vmatprep.subr.mxu0 0.0
        %393 = vmatpush1.msra.mxu0 %v373
        %394 = vmatprep.subr.mxu0 0.0
        %395 = vmatpush1.msra.mxu0 %v374
        %396 = vmatprep.subr.mxu0 0.0
        %397 = vmatpush1.msra.mxu0 %v375
        %398 = vmatprep.subr.mxu0 0.0
        %399 = vmatpush1.msra.mxu0 %v376
        %400 = vmatprep.subr.mxu0 0.0
        %401 = vmatpush1.msra.mxu0 %v377
        %402 = vmatprep.subr.mxu0 0.0
        %403 = vmatpush1.msra.mxu0 %v378
        %404 = vmatprep.subr.mxu0 0.0
        %405 = vmatpush1.msra.mxu0 %v379
        %406 = vmatprep.subr.mxu0 0.0
        %407 = vmatpush1.msra.mxu0 %v380
        %408 = vmatprep.subr.mxu0 0.0
        %409 = vmatpush1.msra.mxu0 %v381
        %410 = vmatprep.subr.mxu0 0.0
        %411 = vmatpush1.msra.mxu0 %v382
        %412 = vmatprep.subr.mxu0 0.0
        %413 = vmatpush1.msra.mxu0 %v383
        %414 = vmatprep.subr.mxu0 0.0
        %415 = vmatpush1.msra.mxu0 %v384
        %416 = vmatprep.subr.mxu0 0.0
        %417 = vmatpush1.msra.mxu0 %v385
        %418 = vmatprep.subr.mxu0 0.0
        %419 = vmatpush1.msra.mxu0 0.0
        %420 = vmatprep.subr.mxu0 0.0
        %421 = vmatpush1.msra.mxu0 0.0
        %422 = vmatprep.subr.mxu0 0.0
        %423 = vmatpush1.msra.mxu0 0.0
        %424 = vmatprep.subr.mxu0 0.0
        %425 = vmatpush1.msra.mxu0 0.0
        %426 = vmatprep.subr.mxu0 0.0
        %427 = vmatpush1.msra.mxu0 0.0
        %428 = vmatprep.subr.mxu0 0.0
        %429 = vmatpush1.msra.mxu0 0.0
        %430 = vmatprep.subr.mxu0 0.0
        %431 = vmatpush1.msra.mxu0 0.0
        %432 = vmatprep.subr.mxu0 0.0
        %433 = vmatpush1.msra.mxu0 0.0
        %434 = vmatprep.subr.mxu0 0.0
        %435 = vmatpush1.msra.mxu0 0.0
        %436 = vmatprep.subr.mxu0 0.0
        %437 = vmatpush1.msra.mxu0 0.0
        %438 = vmatprep.subr.mxu0 0.0
        %439 = vmatpush1.msra.mxu0 0.0
        %440 = vmatprep.subr.mxu0 0.0
        %441 = vmatpush1.msra.mxu0 0.0
        %442 = vmatprep.subr.mxu0 0.0
        %443 = vmatpush1.msra.mxu0 0.0
        %444 = vmatprep.subr.mxu0 0.0
        %445 = vmatpush1.msra.mxu0 0.0
        %446 = vmatprep.subr.mxu0 0.0
        %447 = vmatpush1.msra.mxu0 0.0
        %448 = vmatprep.subr.mxu0 0.0
        %449 = vmatpush1.msra.mxu0 0.0
        %450 = vmatprep.mubr.f32.mxu0 0.0
        %451 = vmatmul.mubr.f32.gmra.mrb[0].mxu0 %v368
        %v452 = vpop.f32.mrb[0].mxu0
        %v453 = vadd.f32 0.0, %v452
        %v454 = vpop.f32.mrb[0].mxu0
        %455 = vdwg.mxu0
        %v456 = vadd.f32 %v367, %v453
        %457 = vst [vmem:[%s178] sm:$0xff] %v456
        %s458 = sand.u32 %s94, 1
        %s459 = scalar_lea.sflag [#allocation4], %s458
        %s460 = sand.u32 %s94, 1
        %s461 = smul.addr %s460, 8
        %s462 = scalar_lea.vmem [#allocation5], %s461
        // Predicated region
        $region37: #{tpu_custom_call.1} parent=31 // pred_check
          %p463 = pneg %p104
        $region38: #{tpu_custom_call.1} parent=31 // pred_check_branch
          %465 = sbr.rel (%p463) target = $region40
        $region39: #{tpu_custom_call.1} parent=31 // pred_region
          %s467 = ssub.s32 128, 128
          %468 = vsyncadd %s459, %s467
          %s469 = smul.addr %s18, 128
          %s470 = scalar_lea.hbm %s3, %s469
          %s472 = sshll.u32 %s462, 4
          %s473 = int_to_ptr.vmem [resolvable:$true] %s472
          %475 = dma.vmem_to_hbm [thread:$0]  %s473, 128, %s470, %s459
        $region40: #{tpu_custom_call.1} parent=31 // pred_fallthru
          _
      $region32: #{tpu_custom_call.1} parent=5 // pred_fallthru
        _
      %p476 = scmp.le.s32.totalorder 2, %s13
      // Predicated region
      $region41: #{tpu_custom_call.1} parent=5 // pred_check
        %p477 = pneg %p476
      $region42: #{tpu_custom_call.1} parent=5 // pred_check_branch
        %479 = sbr.rel (%p477) target = $region44
      $region43: #{tpu_custom_call.1} parent=5 // pred_region
        %s480 = ssub.s32 %s13, 2
        // Predicated region
        $region45: #{tpu_custom_call.1} parent=43 // pred_check
          %p481 = pneg %p110
        $region46: #{tpu_custom_call.1} parent=43 // pred_check_branch
          %483 = sbr.rel (%p481) target = $region48
        $region47: #{tpu_custom_call.1} parent=43 // pred_region
          %s484 = sand.u32 %s95, 1
          %s485 = scalar_lea.sflag [#allocation4], %s484
          %s486 = sand.u32 %s95, 1
          %s487 = smul.addr %s486, 8
          %s488 = scalar_lea.vmem [#allocation5], %s487
          %489 = dma.done %s485, 128
        $region48: #{tpu_custom_call.1} parent=43 // pred_fallthru
          _
      $region44: #{tpu_custom_call.1} parent=5 // pred_fallthru
        _
    $region6: #{tpu_custom_call.1} parent=1 // loop_footer
      %s17 = sadd.s32 1, %s13
    $region7: #{tpu_custom_call.1} parent=1 // loop_footer_branch
      %12 = sbr.rel target = $region3
    $region8: #{tpu_custom_call.1} parent=1 // loop_exit
      _
    %490 = vsyncpa [#allocation3], 1
    %s491 = scalar_lea.sflag [#allocation3], 1
    %492 = vsyncpa %s491, 1
    %493 = vsyncpa [#allocation4], 1
    %s494 = scalar_lea.sflag [#allocation4], 1
    %495 = vsyncpa %s494, 1

</llo_original>
